<compile_context>
chip_gen: v7x
topology: tpu7x:2x2x1
jax: 0.10.0
libtpu: 0.0.40
codegen_flags: <defaults>
</compile_context>

<pallas_src>
import functools

import jax
import jax.numpy as jnp
from jax import lax
from jax.experimental import pallas as pl
from jax.experimental.pallas import tpu as pltpu


def _round_up(x, m):
    return (x + m - 1) // m * m


def _nw_kernel(c_ref, q_ref, k_ref, v_ref, o_ref, m_sc, l_sc, acc_sc,
               *, tile_k, k_valid, needs_mask):
    # c_ref:  (1, 1) SMEM scalar, c = -0.5 * w**2 (bandwidth folded in wrapper)
    # q_ref:  (TILE_N, 1) queries column
    # k_ref/v_ref: (TILE_N, TILE_K) keys/values tile, or (1, TILE_K) shared row
    # o_ref:  (TILE_N, 1) output column (f32), written on the last K step
    # m_sc/l_sc/acc_sc: (TILE_N, 1) online-softmax running max / denom / numerator
    kstep = pl.program_id(1)

    @pl.when(kstep == 0)
    def _():
        m_sc[...] = jnp.full_like(m_sc, -jnp.inf)
        l_sc[...] = jnp.zeros_like(l_sc)
        acc_sc[...] = jnp.zeros_like(acc_sc)

    c = c_ref[0, 0]
    q = q_ref[...].astype(jnp.float32)
    ks = k_ref[...].astype(jnp.float32)
    vs = v_ref[...].astype(jnp.float32)

    d = q - ks                                   # broadcasts if keys are (1, TILE_K)
    s = d * d * c                                # (TILE_N, TILE_K)

    if needs_mask:
        # Explicitly kill padded K lanes (exp(-inf - finite) == 0 exactly), so the
        # axis=1 max/sum never see garbage even when c == 0.
        lane = lax.broadcasted_iota(jnp.int32, s.shape, 1) + kstep * tile_k
        s = jnp.where(lane < k_valid, s, -jnp.inf)

    m_new = jnp.maximum(m_sc[...], jnp.max(s, axis=1, keepdims=True))
    a = jnp.exp(m_sc[...] - m_new)               # rescale of previous partials
    e = jnp.exp(s - m_new)                       # (TILE_N, TILE_K)
    l_sc[...] = a * l_sc[...] + jnp.sum(e, axis=1, keepdims=True)
    acc_sc[...] = a * acc_sc[...] + jnp.sum(e * vs, axis=1, keepdims=True)
    m_sc[...] = m_new

    @pl.when(kstep == pl.num_programs(1) - 1)
    def _():
        # Deferred normalization: one reciprocal-multiply on the narrow column.
        o_ref[...] = (acc_sc[...] * pl.reciprocal(l_sc[...], approx=False)
                      ).astype(o_ref.dtype)


def nw_kernel_regression(w, queries, keys, values, *,
                         max_tile_n=2048, max_tile_k=2048,
                         vmem_budget_bytes=32 * 1024 * 1024):
    """Nadaraya-Watson regression forward.

    queries: (N,). keys/values: (N, K), or (K,) for the shared-row fast path
    (equivalent to x_train.repeat((N, 1)) without materializing it in HBM).
    Returns (N,) float32.
    """
    n = queries.shape[0]
    shared_kv = (keys.ndim == 1)
    if shared_kv:
        kdim = keys.shape[0]
        assert values.shape == (kdim,)
    else:
        assert keys.shape == (n, keys.shape[1])
        kdim = keys.shape[1]
        assert values.shape == (n, kdim)

    # Fold the bandwidth into one constant: scores = c * (q - k)**2, c = -0.5*w^2.
    w32 = jnp.asarray(w, jnp.float32).reshape(())
    c = (-0.5 * w32 * w32).reshape(1, 1)

    itemsize = max(jnp.dtype(keys.dtype).itemsize, jnp.dtype(values.dtype).itemsize)
    row_align, lane_align = 16, 128      # bf16-friendly sublanes / full lanes

    tile_k = min(_round_up(kdim, lane_align), _round_up(int(max_tile_k), lane_align))

    # Row tile: aim for ~2 MiB of keys+values DMA per grid step, capped by
    # max_tile_n, the padded problem size and the VMEM budget.
    kv_rows = 1 if shared_kv else 2
    target_step_bytes = 2 * 1024 * 1024
    tn = max(row_align, target_step_bytes // max(1, kv_rows * tile_k * itemsize))
    tn = min(tn, int(max_tile_n), _round_up(n, row_align))
    tile_n = max(row_align, _round_up(tn, row_align))

    def vmem_estimate(t_n, t_k):
        # 2 pipeline buffers x (keys + values + queries + output) inputs,
        # ~5 f32 (TILE_N, TILE_K) working arrays inside the kernel, and the
        # (m, l, acc) scratch columns.
        kv_n = 1 if shared_kv else t_n
        inputs = 2 * (2 * kv_n * t_k * itemsize + 2 * t_n * 4)
        interm = 5 * t_n * t_k * 4
        scratch = 3 * t_n * 4
        return inputs + interm + scratch

    while tile_n > row_align and vmem_estimate(tile_n, tile_k) > vmem_budget_bytes:
        tile_n = max(row_align, _round_up(tile_n // 2, row_align))
    while tile_k > lane_align and vmem_estimate(tile_n, tile_k) > vmem_budget_bytes:
        tile_k = max(lane_align, _round_up(tile_k // 2, lane_align))

    n_pad = _round_up(n, tile_n)
    k_pad = _round_up(kdim, tile_k)
    num_row_tiles = n_pad // tile_n
    num_k_tiles = k_pad // tile_k
    needs_mask = (k_pad != kdim)

    q2d = queries.reshape(n, 1)
    if n_pad != n:
        q2d = jnp.pad(q2d, ((0, n_pad - n), (0, 0)))

    if shared_kv:
        k2d = keys.reshape(1, kdim)
        v2d = values.reshape(1, kdim)
        if k_pad != kdim:
            k2d = jnp.pad(k2d, ((0, 0), (0, k_pad - kdim)))
            v2d = jnp.pad(v2d, ((0, 0), (0, k_pad - kdim)))
        kv_block = (1, tile_k)
        kv_index_map = lambda i, k: (0, k)       # same shared row for every row tile
    else:
        k2d, v2d = keys, values
        if n_pad != n or k_pad != kdim:
            pad = ((0, n_pad - n), (0, k_pad - kdim))
            k2d = jnp.pad(k2d, pad)
            v2d = jnp.pad(v2d, pad)
        kv_block = (tile_n, tile_k)
        kv_index_map = lambda i, k: (i, k)

    kernel = functools.partial(_nw_kernel, tile_k=tile_k, k_valid=kdim,
                               needs_mask=needs_mask)

    out = pl.pallas_call(
        kernel,
        out_shape=jax.ShapeDtypeStruct((n_pad, 1), jnp.float32),
        grid=(num_row_tiles, num_k_tiles),
        in_specs=[
            pl.BlockSpec(memory_space=pltpu.SMEM),              # c = -0.5 * w**2
            pl.BlockSpec((tile_n, 1), lambda i, k: (i, 0)),     # queries column
            pl.BlockSpec(kv_block, kv_index_map),               # keys tile
            pl.BlockSpec(kv_block, kv_index_map),               # values tile
        ],
        out_specs=pl.BlockSpec((tile_n, 1), lambda i, k: (i, 0)),
        scratch_shapes=[
            pltpu.VMEM((tile_n, 1), jnp.float32),   # running max m
            pltpu.VMEM((tile_n, 1), jnp.float32),   # running denom l
            pltpu.VMEM((tile_n, 1), jnp.float32),   # running numerator acc
        ],
        compiler_params=pltpu.CompilerParams(
            dimension_semantics=("parallel", "arbitrary"),
            vmem_limit_bytes=int(max(vmem_budget_bytes, 32 * 1024 * 1024)),
        ),
    )(c, q2d, k2d, v2d)
    return out.reshape(-1)[:n]


def _reference(w, queries, keys, values):
    w32 = jnp.asarray(w, jnp.float32)
    q = queries.astype(jnp.float32)[:, None]
    s = -(((q - keys.astype(jnp.float32)) * w32) ** 2) / 2.0
    a = jax.nn.softmax(s, axis=1)
    return jnp.sum(a * values.astype(jnp.float32), axis=1)


def f(x):
    return 2.0 * jnp.sin(x) + x ** 0.8


if __name__ == "__main__":
    key = jax.random.PRNGKey(0)
    k_w, k_x, k_noise, k_big = jax.random.split(key, 4)

    # --- Spec-sized problem: n_train = 50 keys, x_test = arange(0, 5, 0.1) -> 50 queries ---
    n_train = 50
    x_train = jnp.sort(jax.random.uniform(k_x, (n_train,)) * 5.0)
    y_train = f(x_train) + 0.5 * jax.random.normal(k_noise, (n_train,))
    x_test = jnp.arange(50, dtype=jnp.float32) * 0.1
    n_test = x_test.shape[0]

    queries = x_test                             # (N,)
    keys = jnp.tile(x_train, (n_test, 1))        # (N, K)  == x_train.repeat((n_test, 1))
    values = jnp.tile(y_train, (n_test, 1))      # (N, K)  == y_train.repeat((n_test, 1))
    w = jax.random.uniform(k_w, (1,), dtype=jnp.float32)[0]   # nn.Parameter(torch.rand((1,)))

    out = jax.block_until_ready(nw_kernel_regression(w, queries, keys, values))
    ref = _reference(w, queries, keys, values)
    assert out.shape == (n_test,)
    assert jnp.allclose(out, ref, atol=1e-5, rtol=1e-5)

    # --- Shared-row fast path: 1-D x_train/y_train, no (N, K) tiling in HBM ---
    out_fast = jax.block_until_ready(nw_kernel_regression(w, queries, x_train, y_train))
    assert out_fast.shape == (n_test,)
    assert jnp.allclose(out_fast, ref, atol=1e-5, rtol=1e-5)

    # --- Multi-tile check: row grid + K grid (online softmax + lane mask), bf16 inputs ---
    n_big, k_big_dim = 1024, 384
    qb = jax.random.uniform(k_big, (n_big,), dtype=jnp.float32) * 5.0
    kb = jax.random.uniform(jax.random.fold_in(k_big, 1), (n_big, k_big_dim)) * 5.0
    vb = jax.random.normal(jax.random.fold_in(k_big, 2), (n_big, k_big_dim))
    qb16, kb16, vb16 = (a.astype(jnp.bfloat16) for a in (qb, kb, vb))

    out_big = jax.block_until_ready(
        nw_kernel_regression(w, qb16, kb16, vb16, max_tile_n=256, max_tile_k=256))
    ref_big = _reference(w, qb16, kb16, vb16)
    assert out_big.shape == (n_big,)
    assert jnp.allclose(out_big, ref_big, atol=2e-3, rtol=2e-3)

    print("KERNEL_OK")
</pallas_src>

<mosaic_0001>
module attributes {stable_mosaic.version = 11 : i64} {
  func.func @_nw_kernel(%arg0: i32, %arg1: i32, %arg2: memref<1x1xf32, #tpu.memory_space<smem>>, %arg3: memref<64x1xf32, #tpu.memory_space<vmem>>, %arg4: memref<64x128xf32, #tpu.memory_space<vmem>>, %arg5: memref<64x128xf32, #tpu.memory_space<vmem>>, %arg6: memref<64x1xf32, #tpu.memory_space<vmem>>, %arg7: memref<64x1xf32, #tpu.memory_space<vmem>>, %arg8: memref<64x1xf32, #tpu.memory_space<vmem>>, %arg9: memref<64x1xf32, #tpu.memory_space<vmem>>) attributes {dimension_semantics = [#tpu.dimension_semantics<parallel>, #tpu.dimension_semantics<arbitrary>], iteration_bounds = array<i64: 1, 1>, scalar_prefetch = 0 : i64, scratch_operands = 3 : i64, tpu.core_type = #tpu.core_type<tc>, window_params = [{transform_indices = @transform_0, window_bounds = array<i64: 1, 1>}, {transform_indices = @transform_1, window_bounds = array<i64: 64, 1>}, {transform_indices = @transform_2, window_bounds = array<i64: 64, 128>}, {transform_indices = @transform_3, window_bounds = array<i64: 64, 128>}, {transform_indices = @transform_4, window_bounds = array<i64: 64, 1>}]} {
    %c0_i32 = arith.constant 0 : i32
    %0 = arith.cmpi eq, %arg1, %c0_i32 : i32
    %1 = arith.extui %0 : i1 to i32
    %c0_i32_0 = arith.constant 0 : i32
    %2 = arith.cmpi ne, %1, %c0_i32_0 : i32
    scf.if %2 {
      %cst_27 = arith.constant 0xFF800000 : f32
      %47 = vector.broadcast %cst_27 : f32 to vector<64x1xf32>
      %c0_28 = arith.constant 0 : index
      %c0_29 = arith.constant 0 : index
      %48 = vector.load %arg7[%c0_28, %c0_29] : memref<64x1xf32, #tpu.memory_space<vmem>>, vector<64x1xf32>
      tpu.vector_store %arg7[%c0_28, %c0_29], %47 {strides = array<i32>} : memref<64x1xf32, #tpu.memory_space<vmem>>, vector<64x1xf32>,
      %cst_30 = arith.constant 0.000000e+00 : f32
      %49 = vector.broadcast %cst_30 : f32 to vector<64x1xf32>
      %c0_31 = arith.constant 0 : index
      %c0_32 = arith.constant 0 : index
      %50 = vector.load %arg8[%c0_31, %c0_32] : memref<64x1xf32, #tpu.memory_space<vmem>>, vector<64x1xf32>
      tpu.vector_store %arg8[%c0_31, %c0_32], %49 {strides = array<i32>} : memref<64x1xf32, #tpu.memory_space<vmem>>, vector<64x1xf32>,
      %cst_33 = arith.constant 0.000000e+00 : f32
      %51 = vector.broadcast %cst_33 : f32 to vector<64x1xf32>
      %c0_34 = arith.constant 0 : index
      %c0_35 = arith.constant 0 : index
      %52 = vector.load %arg9[%c0_34, %c0_35] : memref<64x1xf32, #tpu.memory_space<vmem>>, vector<64x1xf32>
      tpu.vector_store %arg9[%c0_34, %c0_35], %51 {strides = array<i32>} : memref<64x1xf32, #tpu.memory_space<vmem>>, vector<64x1xf32>,
    } else {
    }
    %c0 = arith.constant 0 : index
    %c0_1 = arith.constant 0 : index
    %3 = memref.load %arg2[%c0, %c0_1] : memref<1x1xf32, #tpu.memory_space<smem>>
    %c0_2 = arith.constant 0 : index
    %c0_3 = arith.constant 0 : index
    %4 = vector.load %arg3[%c0_2, %c0_3] : memref<64x1xf32, #tpu.memory_space<vmem>>, vector<64x1xf32>
    %c0_4 = arith.constant 0 : index
    %c0_5 = arith.constant 0 : index
    %5 = vector.load %arg4[%c0_4, %c0_5] : memref<64x128xf32, #tpu.memory_space<vmem>>, vector<64x128xf32>
    %c0_6 = arith.constant 0 : index
    %c0_7 = arith.constant 0 : index
    %6 = vector.load %arg5[%c0_6, %c0_7] : memref<64x128xf32, #tpu.memory_space<vmem>>, vector<64x128xf32>
    %7 = vector.broadcast %4 : vector<64x1xf32> to vector<64x128xf32>
    %8 = arith.subf %7, %5 : vector<64x128xf32>
    %9 = arith.mulf %8, %8 : vector<64x128xf32>
    %10 = vector.broadcast %3 : f32 to vector<64x128xf32>
    %11 = arith.mulf %9, %10 : vector<64x128xf32>
    %12 = tpu.iota {dimensions = array<i32: 1>} : vector<64x128xi32>
    %c128_i32 = arith.constant 128 : i32
    %13 = arith.muli %arg1, %c128_i32 : i32
    %14 = vector.broadcast %13 : i32 to vector<64x128xi32>
    %15 = arith.addi %12, %14 : vector<64x128xi32>
    %c50_i32 = arith.constant 50 : i32
    %16 = vector.broadcast %c50_i32 : i32 to vector<64x128xi32>
    %17 = arith.cmpi slt, %15, %16 : vector<64x128xi32>
    %cst = arith.constant 0xFF800000 : f32
    %18 = vector.broadcast %cst : f32 to vector<64x128xf32>
    %19 = arith.select %17, %11, %18 : vector<64x128xi1>, vector<64x128xf32>
    %c0_8 = arith.constant 0 : index
    %c0_9 = arith.constant 0 : index
    %20 = vector.load %arg7[%c0_8, %c0_9] : memref<64x1xf32, #tpu.memory_space<vmem>>, vector<64x1xf32>
    %cst_10 = arith.constant dense<0xFF800000> : vector<64xf32>
    %21 = vector.multi_reduction <maximumf>, %19, %cst_10 [1] : vector<64x128xf32> to vector<64xf32>
    %22 = vector.shape_cast %21 : vector<64xf32> to vector<64x1xf32>
    %23 = arith.maximumf %20, %22 : vector<64x1xf32>
    %c0_11 = arith.constant 0 : index
    %c0_12 = arith.constant 0 : index
    %24 = vector.load %arg7[%c0_11, %c0_12] : memref<64x1xf32, #tpu.memory_space<vmem>>, vector<64x1xf32>
    %25 = arith.subf %24, %23 : vector<64x1xf32>
    %26 = math.exp %25 : vector<64x1xf32>
    %27 = vector.broadcast %23 : vector<64x1xf32> to vector<64x128xf32>
    %28 = arith.subf %19, %27 : vector<64x128xf32>
    %29 = math.exp %28 : vector<64x128xf32>
    %c0_13 = arith.constant 0 : index
    %c0_14 = arith.constant 0 : index
    %30 = vector.load %arg8[%c0_13, %c0_14] : memref<64x1xf32, #tpu.memory_space<vmem>>, vector<64x1xf32>
    %31 = arith.mulf %26, %30 : vector<64x1xf32>
    %cst_15 = arith.constant dense<0.000000e+00> : vector<64xf32>
    %32 = vector.multi_reduction <add>, %29, %cst_15 [1] : vector<64x128xf32> to vector<64xf32>
    %33 = vector.shape_cast %32 : vector<64xf32> to vector<64x1xf32>
    %34 = arith.addf %31, %33 : vector<64x1xf32>
    %c0_16 = arith.constant 0 : index
    %c0_17 = arith.constant 0 : index
    %35 = vector.load %arg8[%c0_16, %c0_17] : memref<64x1xf32, #tpu.memory_space<vmem>>, vector<64x1xf32>
    tpu.vector_store %arg8[%c0_16, %c0_17], %34 {strides = array<i32>} : memref<64x1xf32, #tpu.memory_space<vmem>>, vector<64x1xf32>,
    %c0_18 = arith.constant 0 : index
    %c0_19 = arith.constant 0 : index
    %36 = vector.load %arg9[%c0_18, %c0_19] : memref<64x1xf32, #tpu.memory_space<vmem>>, vector<64x1xf32>
    %37 = arith.mulf %26, %36 : vector<64x1xf32>
    %38 = arith.mulf %29, %6 : vector<64x128xf32>
    %cst_20 = arith.constant dense<0.000000e+00> : vector<64xf32>
    %39 = vector.multi_reduction <add>, %38, %cst_20 [1] : vector<64x128xf32> to vector<64xf32>
    %40 = vector.shape_cast %39 : vector<64xf32> to vector<64x1xf32>
    %41 = arith.addf %37, %40 : vector<64x1xf32>
    %c0_21 = arith.constant 0 : index
    %c0_22 = arith.constant 0 : index
    %42 = vector.load %arg9[%c0_21, %c0_22] : memref<64x1xf32, #tpu.memory_space<vmem>>, vector<64x1xf32>
    tpu.vector_store %arg9[%c0_21, %c0_22], %41 {strides = array<i32>} : memref<64x1xf32, #tpu.memory_space<vmem>>, vector<64x1xf32>,
    %c0_23 = arith.constant 0 : index
    %c0_24 = arith.constant 0 : index
    %43 = vector.load %arg7[%c0_23, %c0_24] : memref<64x1xf32, #tpu.memory_space<vmem>>, vector<64x1xf32>
    tpu.vector_store %arg7[%c0_23, %c0_24], %23 {strides = array<i32>} : memref<64x1xf32, #tpu.memory_space<vmem>>, vector<64x1xf32>,
    %c0_i32_25 = arith.constant 0 : i32
    %44 = arith.cmpi eq, %arg1, %c0_i32_25 : i32
    %45 = arith.extui %44 : i1 to i32
    %c0_i32_26 = arith.constant 0 : i32
    %46 = arith.cmpi ne, %45, %c0_i32_26 : i32
    scf.if %46 {
      %c0_27 = arith.constant 0 : index
      %c0_28 = arith.constant 0 : index
      %47 = vector.load %arg9[%c0_27, %c0_28] : memref<64x1xf32, #tpu.memory_space<vmem>>, vector<64x1xf32>
      %c0_29 = arith.constant 0 : index
      %c0_30 = arith.constant 0 : index
      %48 = vector.load %arg8[%c0_29, %c0_30] : memref<64x1xf32, #tpu.memory_space<vmem>>, vector<64x1xf32>
      %49 = tpu.reciprocal %48 : vector<64x1xf32> -> vector<64x1xf32>
      %50 = arith.mulf %47, %49 : vector<64x1xf32>
      %c0_31 = arith.constant 0 : index
      %c0_32 = arith.constant 0 : index
      %51 = vector.load %arg6[%c0_31, %c0_32] : memref<64x1xf32, #tpu.memory_space<vmem>>, vector<64x1xf32>
      tpu.vector_store %arg6[%c0_31, %c0_32], %50 {strides = array<i32>} : memref<64x1xf32, #tpu.memory_space<vmem>>, vector<64x1xf32>,
    } else {
    }
    return
  }
  func.func @transform_0(%arg0: i32, %arg1: i32) -> (i32, i32) {
    %c0_i32 = arith.constant 0 : i32
    %c0_i32_0 = arith.constant 0 : i32
    %c0_i32_1 = arith.constant 0 : i32
    return %c0_i32, %c0_i32_0 : i32, i32
  }
  func.func @transform_1(%arg0: i32, %arg1: i32) -> (i32, i32) {
    %c0_i32 = arith.constant 0 : i32
    %c0_i32_0 = arith.constant 0 : i32
    return %arg0, %c0_i32 : i32, i32
  }
  func.func @transform_2(%arg0: i32, %arg1: i32) -> (i32, i32) {
    %c0_i32 = arith.constant 0 : i32
    return %arg0, %arg1 : i32, i32
  }
  func.func @transform_3(%arg0: i32, %arg1: i32) -> (i32, i32) {
    %c0_i32 = arith.constant 0 : i32
    return %arg0, %arg1 : i32, i32
  }
  func.func @transform_4(%arg0: i32, %arg1: i32) -> (i32, i32) {
    %c0_i32 = arith.constant 0 : i32
    %c0_i32_0 = arith.constant 0 : i32
    return %arg0, %c0_i32 : i32, i32
  }
}

</mosaic_0001>

<llo_original>
// kernel: tpu_custom_call.1
$region0: #{tpu_custom_call.1}
  #allocation0 [shape = 'u32[]', space=smem, size = 0x4, offset = 0x4, fixed_abs, tag = 'smem constant byte address 0x4 - core index']
  #allocation1 [shape = 'u32[144,128]{1,0:T(1,128)}', space=vmem, size = 0x12000, scoped, tag = 'internal scratch']
  #allocation2 [shape = 'f32[64,1]{1,0:T(8,128)}', space=vmem, size = 0x8000, scoped, tag = 'scratch operand']
  #allocation3 [shape = 'f32[64,1]{1,0:T(8,128)}', space=vmem, size = 0x8000, scoped, tag = 'scratch operand']
  #allocation4 [shape = 'f32[64,1]{1,0:T(8,128)}', space=vmem, size = 0x8000, scoped, tag = 'scratch operand']
  #allocation5 [shape = 'f32[1,1]{1,0:T(1,128)S(6)}', space=smem, size = 0x200, scoped, tag = 'scoped memory for tpu_custom_call.1']
  %s0 = inlined_call_operand.<no memory space> [shape: f32[1,1], index: 0, kind: input, shape index: {}]
  %s1 = inlined_call_operand.vmem [shape: f32[64,1], index: 1, kind: input, shape index: {}]
  %s2 = inlined_call_operand.vmem [shape: f32[64,128], index: 2, kind: input, shape index: {}]
  %s3 = inlined_call_operand.hbm [shape: f32[64,128], index: 3, kind: input, shape index: {}]
  %s4 = inlined_call_operand.vmem [shape: f32[64,1], index: 4, kind: output, shape index: {}]
  %s5 = sld [smem:[#allocation0]]
  $region38: #{tpu_custom_call.1} parent=0
    _
  %s7 = ssub.s32 1, %s5
  %s8 = scalar_select 0, %s7, %s5
  %9 = sst [smem:[#allocation5]] %s0
  $region1: #{tpu_custom_call.1} parent=0
    #allocation6 [shape = 'u8[32768]{0}', space=vmem, size = 0x8000, scoped, tag = 'input window, operand 3, single buffered']
    #allocation7 [shape = 's32[1]{0}', space=sflag, size = 0x4, scoped, tag = 'scoped memory for tpu_custom_call.1']
    %10 = vsyncpa [#allocation7], 0
    // Predicated region
    $region2: #{tpu_custom_call.1} parent=1 // pred_check
      _
    $region3: #{tpu_custom_call.1} parent=1 // pred_check_branch
      %12 = sbr.rel (0) target = $region5
    $region4: #{tpu_custom_call.1} parent=1 // pred_region
      _
    $region5: #{tpu_custom_call.1} parent=1 // pred_fallthru
      _
    // Predicated region
    $region6: #{tpu_custom_call.1} parent=1 // pred_check
      _
    $region7: #{tpu_custom_call.1} parent=1 // pred_check_branch
      %14 = sbr.rel (0) target = $region9
    $region8: #{tpu_custom_call.1} parent=1 // pred_region
      _
    $region9: #{tpu_custom_call.1} parent=1 // pred_fallthru
      _
    // Predicated region
    $region10: #{tpu_custom_call.1} parent=1 // pred_check
      _
    $region11: #{tpu_custom_call.1} parent=1 // pred_check_branch
      %16 = sbr.rel (0) target = $region13
    $region12: #{tpu_custom_call.1} parent=1 // pred_region
      _
    $region13: #{tpu_custom_call.1} parent=1 // pred_fallthru
      _
    // Predicated region
    $region14: #{tpu_custom_call.1} parent=1 // pred_check
      _
    $region15: #{tpu_custom_call.1} parent=1 // pred_check_branch
      %18 = sbr.rel (0) target = $region17
    $region16: #{tpu_custom_call.1} parent=1 // pred_region
      %s20 = ssub.s32 1024, 1024
      %21 = vsyncadd [#allocation7], %s20
      %s22 = sshll.u32 [#allocation6], 4
      %s23 = int_to_ptr.vmem [resolvable:$true] %s22
      %28 = dma.hbm_to_vmem [thread:$0]  %s3, 1024, %s23, [#allocation7], 128, 128, 8
    $region17: #{tpu_custom_call.1} parent=1 // pred_fallthru
      _
    // Predicated region
    $region18: #{tpu_custom_call.1} parent=1 // pred_check
      _
    $region19: #{tpu_custom_call.1} parent=1 // pred_check_branch
      %30 = sbr.rel (0) target = $region21
    $region20: #{tpu_custom_call.1} parent=1 // pred_region
      %31 = dma.done [#allocation7], 1024
    $region21: #{tpu_custom_call.1} parent=1 // pred_fallthru
      _
    %p32 = scmp.eq.s32.totalorder 0, 0
    // Predicated region
    $region22: #{tpu_custom_call.1} parent=1 // pred_check
      %p33 = pneg %p32
    $region23: #{tpu_custom_call.1} parent=1 // pred_check_branch
      %35 = sbr.rel (%p33) target = $region25
    $region24: #{tpu_custom_call.1} parent=1 // pred_region
      %vm36 = vcmask 7168
      %37 = vst.msk [vmem:[#allocation2] sm:$0xff] %vm36, -inf
      %38 = vst.msk [vmem:[#allocation2 + $0x8] sm:$0xff] %vm36, -inf
      %39 = vst.msk [vmem:[#allocation2 + $0x10] sm:$0xff] %vm36, -inf
      %40 = vst.msk [vmem:[#allocation2 + $0x18] sm:$0xff] %vm36, -inf
      %41 = vst.msk [vmem:[#allocation2 + $0x20] sm:$0xff] %vm36, -inf
      %42 = vst.msk [vmem:[#allocation2 + $0x28] sm:$0xff] %vm36, -inf
      %43 = vst.msk [vmem:[#allocation2 + $0x30] sm:$0xff] %vm36, -inf
      %44 = vst.msk [vmem:[#allocation2 + $0x38] sm:$0xff] %vm36, -inf
      %45 = vst.msk [vmem:[#allocation3] sm:$0xff] %vm36, 0.0
      %46 = vst.msk [vmem:[#allocation3 + $0x8] sm:$0xff] %vm36, 0.0
      %47 = vst.msk [vmem:[#allocation3 + $0x10] sm:$0xff] %vm36, 0.0
      %48 = vst.msk [vmem:[#allocation3 + $0x18] sm:$0xff] %vm36, 0.0
      %49 = vst.msk [vmem:[#allocation3 + $0x20] sm:$0xff] %vm36, 0.0
      %50 = vst.msk [vmem:[#allocation3 + $0x28] sm:$0xff] %vm36, 0.0
      %51 = vst.msk [vmem:[#allocation3 + $0x30] sm:$0xff] %vm36, 0.0
      %52 = vst.msk [vmem:[#allocation3 + $0x38] sm:$0xff] %vm36, 0.0
      %53 = vst.msk [vmem:[#allocation4] sm:$0xff] %vm36, 0.0
      %54 = vst.msk [vmem:[#allocation4 + $0x8] sm:$0xff] %vm36, 0.0
      %55 = vst.msk [vmem:[#allocation4 + $0x10] sm:$0xff] %vm36, 0.0
      %56 = vst.msk [vmem:[#allocation4 + $0x18] sm:$0xff] %vm36, 0.0
      %57 = vst.msk [vmem:[#allocation4 + $0x20] sm:$0xff] %vm36, 0.0
      %58 = vst.msk [vmem:[#allocation4 + $0x28] sm:$0xff] %vm36, 0.0
      %59 = vst.msk [vmem:[#allocation4 + $0x30] sm:$0xff] %vm36, 0.0
      %60 = vst.msk [vmem:[#allocation4 + $0x38] sm:$0xff] %vm36, 0.0
    $region25: #{tpu_custom_call.1} parent=1 // pred_fallthru
      _
    %s61 = sld [smem:[#allocation5]]
    %v62 = vld [vmem:[%s1] sm:$0xff]
    %v63 = vld [vmem:[%s1 + $0x8] sm:$0xff]
    %v64 = vld [vmem:[%s1 + $0x10] sm:$0xff]
    %v65 = vld [vmem:[%s1 + $0x18] sm:$0xff]
    %v66 = vld [vmem:[%s1 + $0x20] sm:$0xff]
    %v67 = vld [vmem:[%s1 + $0x28] sm:$0xff]
    %v68 = vld [vmem:[%s1 + $0x30] sm:$0xff]
    %v69 = vld [vmem:[%s1 + $0x38] sm:$0xff]
    %v70 = vld [vmem:[%s2] sm:$0xff]
    %v71 = vld [vmem:[%s2 + $0x8] sm:$0xff]
    %v72 = vld [vmem:[%s2 + $0x10] sm:$0xff]
    %v73 = vld [vmem:[%s2 + $0x18] sm:$0xff]
    %v74 = vld [vmem:[%s2 + $0x20] sm:$0xff]
    %v75 = vld [vmem:[%s2 + $0x28] sm:$0xff]
    %v76 = vld [vmem:[%s2 + $0x30] sm:$0xff]
    %v77 = vld [vmem:[%s2 + $0x38] sm:$0xff]
    %v78 = vld [vmem:[#allocation6] sm:$0xff]
    %v79 = vld [vmem:[#allocation6 + $0x8] sm:$0xff]
    %v80 = vld [vmem:[#allocation6 + $0x10] sm:$0xff]
    %v81 = vld [vmem:[#allocation6 + $0x18] sm:$0xff]
    %v82 = vld [vmem:[#allocation6 + $0x20] sm:$0xff]
    %v83 = vld [vmem:[#allocation6 + $0x28] sm:$0xff]
    %v84 = vld [vmem:[#allocation6 + $0x30] sm:$0xff]
    %v85 = vld [vmem:[#allocation6 + $0x38] sm:$0xff]
    %87 = vset.pattern.permute.xlu0 0
    %88 = vperm.xlu0 %87, %v62
    %v89 = vpop.permute.xlu0 %88
    %92 = vset.pattern.permute.xlu0 0
    %93 = vperm.xlu0 %92, %v63
    %v94 = vpop.permute.xlu0 %93
    %97 = vset.pattern.permute.xlu0 0
    %98 = vperm.xlu0 %97, %v64
    %v99 = vpop.permute.xlu0 %98
    %102 = vset.pattern.permute.xlu0 0
    %103 = vperm.xlu0 %102, %v65
    %v104 = vpop.permute.xlu0 %103
    %107 = vset.pattern.permute.xlu0 0
    %108 = vperm.xlu0 %107, %v66
    %v109 = vpop.permute.xlu0 %108
    %112 = vset.pattern.permute.xlu0 0
    %113 = vperm.xlu0 %112, %v67
    %v114 = vpop.permute.xlu0 %113
    %117 = vset.pattern.permute.xlu0 0
    %118 = vperm.xlu0 %117, %v68
    %v119 = vpop.permute.xlu0 %118
    %122 = vset.pattern.permute.xlu0 0
    %123 = vperm.xlu0 %122, %v69
    %v124 = vpop.permute.xlu0 %123
    %v126 = vsub.f32 %v89, %v70
    %v127 = vsub.f32 %v94, %v71
    %v128 = vsub.f32 %v99, %v72
    %v129 = vsub.f32 %v104, %v73
    %v130 = vsub.f32 %v109, %v74
    %v131 = vsub.f32 %v114, %v75
    %v132 = vsub.f32 %v119, %v76
    %v133 = vsub.f32 %v124, %v77
    %v134 = vmul.f32 %v126, %v126
    %v135 = vmul.f32 %v127, %v127
    %v136 = vmul.f32 %v128, %v128
    %v137 = vmul.f32 %v129, %v129
    %v138 = vmul.f32 %v130, %v130
    %v139 = vmul.f32 %v131, %v131
    %v140 = vmul.f32 %v132, %v132
    %v141 = vmul.f32 %v133, %v133
    %v142 = vstv %s61
    %v143 = vmul.f32 %v134, %v142
    %v144 = vmul.f32 %v135, %v142
    %v145 = vmul.f32 %v136, %v142
    %v146 = vmul.f32 %v137, %v142
    %v147 = vmul.f32 %v138, %v142
    %v148 = vmul.f32 %v139, %v142
    %v149 = vmul.f32 %v140, %v142
    %v150 = vmul.f32 %v141, %v142
    %v151 = vlaneseq
    %v152 = vand.u32 %v151, 127
    %s153 = smul.u32 0, 128
    %v154 = vstv %s153
    %v155 = vadd.s32 %v152, %v154
    %vm156 = vcmp.lt.s32.totalorder %v155, 50
    %v157 = vsel %vm156, %v143, -inf
    %v158 = vsel %vm156, %v144, -inf
    %v159 = vsel %vm156, %v145, -inf
    %v160 = vsel %vm156, %v146, -inf
    %v161 = vsel %vm156, %v147, -inf
    %v162 = vsel %vm156, %v148, -inf
    %v163 = vsel %vm156, %v149, -inf
    %v164 = vsel %vm156, %v150, -inf
    %v165 = vld [vmem:[#allocation2] sm:$0xff]
    %v166 = vld [vmem:[#allocation2 + $0x8] sm:$0xff]
    %v167 = vld [vmem:[#allocation2 + $0x10] sm:$0xff]
    %v168 = vld [vmem:[#allocation2 + $0x18] sm:$0xff]
    %v169 = vld [vmem:[#allocation2 + $0x20] sm:$0xff]
    %v170 = vld [vmem:[#allocation2 + $0x28] sm:$0xff]
    %v171 = vld [vmem:[#allocation2 + $0x30] sm:$0xff]
    %v172 = vld [vmem:[#allocation2 + $0x38] sm:$0xff]
    %173 = vmax.xlane.f32.xlu0 %v157
    %v174 = vpop.xlane.xlu0 %173
    %175 = vmax.xlane.f32.xlu0 %v158
    %v176 = vpop.xlane.xlu0 %175
    %177 = vmax.xlane.f32.xlu0 %v159
    %v178 = vpop.xlane.xlu0 %177
    %179 = vmax.xlane.f32.xlu0 %v160
    %v180 = vpop.xlane.xlu0 %179
    %181 = vmax.xlane.f32.xlu0 %v161
    %v182 = vpop.xlane.xlu0 %181
    %183 = vmax.xlane.f32.xlu0 %v162
    %v184 = vpop.xlane.xlu0 %183
    %185 = vmax.xlane.f32.xlu0 %v163
    %v186 = vpop.xlane.xlu0 %185
    %187 = vmax.xlane.f32.xlu0 %v164
    %v188 = vpop.xlane.xlu0 %187
    %v189 = vmax.f32 %v165, %v174
    %v190 = vmax.f32 %v166, %v176
    %v191 = vmax.f32 %v167, %v178
    %v192 = vmax.f32 %v168, %v180
    %v193 = vmax.f32 %v169, %v182
    %v194 = vmax.f32 %v170, %v184
    %v195 = vmax.f32 %v171, %v186
    %v196 = vmax.f32 %v172, %v188
    %v197 = vsub.f32 %v165, %v189
    %v198 = vsub.f32 %v166, %v190
    %v199 = vsub.f32 %v167, %v191
    %v200 = vsub.f32 %v168, %v192
    %v201 = vsub.f32 %v169, %v193
    %v202 = vsub.f32 %v170, %v194
    %v203 = vsub.f32 %v171, %v195
    %v204 = vsub.f32 %v172, %v196
    %v205 = vmul.f32 %v197, 1.442695
    %v206 = vpow.pop %v205
    %v207 = vmul.f32 %v198, 1.442695
    %v208 = vpow.pop %v207
    %v209 = vmul.f32 %v199, 1.442695
    %v210 = vpow.pop %v209
    %v211 = vmul.f32 %v200, 1.442695
    %v212 = vpow.pop %v211
    %v213 = vmul.f32 %v201, 1.442695
    %v214 = vpow.pop %v213
    %v215 = vmul.f32 %v202, 1.442695
    %v216 = vpow.pop %v215
    %v217 = vmul.f32 %v203, 1.442695
    %v218 = vpow.pop %v217
    %v219 = vmul.f32 %v204, 1.442695
    %v220 = vpow.pop %v219
    %222 = vset.pattern.permute.xlu0 0
    %223 = vperm.xlu0 %222, %v189
    %v224 = vpop.permute.xlu0 %223
    %227 = vset.pattern.permute.xlu0 0
    %228 = vperm.xlu0 %227, %v190
    %v229 = vpop.permute.xlu0 %228
    %232 = vset.pattern.permute.xlu0 0
    %233 = vperm.xlu0 %232, %v191
    %v234 = vpop.permute.xlu0 %233
    %237 = vset.pattern.permute.xlu0 0
    %238 = vperm.xlu0 %237, %v192
    %v239 = vpop.permute.xlu0 %238
    %242 = vset.pattern.permute.xlu0 0
    %243 = vperm.xlu0 %242, %v193
    %v244 = vpop.permute.xlu0 %243
    %247 = vset.pattern.permute.xlu0 0
    %248 = vperm.xlu0 %247, %v194
    %v249 = vpop.permute.xlu0 %248
    %252 = vset.pattern.permute.xlu0 0
    %253 = vperm.xlu0 %252, %v195
    %v254 = vpop.permute.xlu0 %253
    %257 = vset.pattern.permute.xlu0 0
    %258 = vperm.xlu0 %257, %v196
    %v259 = vpop.permute.xlu0 %258
    %v261 = vsub.f32 %v157, %v224
    %v262 = vsub.f32 %v158, %v229
    %v263 = vsub.f32 %v159, %v234
    %v264 = vsub.f32 %v160, %v239
    %v265 = vsub.f32 %v161, %v244
    %v266 = vsub.f32 %v162, %v249
    %v267 = vsub.f32 %v163, %v254
    %v268 = vsub.f32 %v164, %v259
    %v269 = vmul.f32 %v261, 1.442695
    %v270 = vpow.pop %v269
    %v271 = vmul.f32 %v262, 1.442695
    %v272 = vpow.pop %v271
    %v273 = vmul.f32 %v263, 1.442695
    %v274 = vpow.pop %v273
    %v275 = vmul.f32 %v264, 1.442695
    %v276 = vpow.pop %v275
    %v277 = vmul.f32 %v265, 1.442695
    %v278 = vpow.pop %v277
    %v279 = vmul.f32 %v266, 1.442695
    %v280 = vpow.pop %v279
    %v281 = vmul.f32 %v267, 1.442695
    %v282 = vpow.pop %v281
    %v283 = vmul.f32 %v268, 1.442695
    %v284 = vpow.pop %v283
    %v285 = vld [vmem:[#allocation3] sm:$0xff]
    %v286 = vld [vmem:[#allocation3 + $0x8] sm:$0xff]
    %v287 = vld [vmem:[#allocation3 + $0x10] sm:$0xff]
    %v288 = vld [vmem:[#allocation3 + $0x18] sm:$0xff]
    %v289 = vld [vmem:[#allocation3 + $0x20] sm:$0xff]
    %v290 = vld [vmem:[#allocation3 + $0x28] sm:$0xff]
    %v291 = vld [vmem:[#allocation3 + $0x30] sm:$0xff]
    %v292 = vld [vmem:[#allocation3 + $0x38] sm:$0xff]
    %v293 = vmul.f32 %v206, %v285
    %v294 = vmul.f32 %v208, %v286
    %v295 = vmul.f32 %v210, %v287
    %v296 = vmul.f32 %v212, %v288
    %v297 = vmul.f32 %v214, %v289
    %v298 = vmul.f32 %v216, %v290
    %v299 = vmul.f32 %v218, %v291
    %v300 = vmul.f32 %v220, %v292
    %301 = vadd.xlane.f32.xlu0 %v270
    %v302 = vpop.xlane.xlu0 %301
    %303 = vadd.xlane.f32.xlu0 %v272
    %v304 = vpop.xlane.xlu0 %303
    %305 = vadd.xlane.f32.xlu0 %v274
    %v306 = vpop.xlane.xlu0 %305
    %307 = vadd.xlane.f32.xlu0 %v276
    %v308 = vpop.xlane.xlu0 %307
    %309 = vadd.xlane.f32.xlu0 %v278
    %v310 = vpop.xlane.xlu0 %309
    %311 = vadd.xlane.f32.xlu0 %v280
    %v312 = vpop.xlane.xlu0 %311
    %313 = vadd.xlane.f32.xlu0 %v282
    %v314 = vpop.xlane.xlu0 %313
    %315 = vadd.xlane.f32.xlu0 %v284
    %v316 = vpop.xlane.xlu0 %315
    %v317 = vadd.f32 %v293, %v302
    %v318 = vadd.f32 %v294, %v304
    %v319 = vadd.f32 %v295, %v306
    %v320 = vadd.f32 %v296, %v308
    %v321 = vadd.f32 %v297, %v310
    %v322 = vadd.f32 %v298, %v312
    %v323 = vadd.f32 %v299, %v314
    %v324 = vadd.f32 %v300, %v316
    %vm325 = vcmask 7168
    %326 = vst.msk [vmem:[#allocation3] sm:$0xff] %vm325, %v317
    %327 = vst.msk [vmem:[#allocation3 + $0x8] sm:$0xff] %vm325, %v318
    %328 = vst.msk [vmem:[#allocation3 + $0x10] sm:$0xff] %vm325, %v319
    %329 = vst.msk [vmem:[#allocation3 + $0x18] sm:$0xff] %vm325, %v320
    %330 = vst.msk [vmem:[#allocation3 + $0x20] sm:$0xff] %vm325, %v321
    %331 = vst.msk [vmem:[#allocation3 + $0x28] sm:$0xff] %vm325, %v322
    %332 = vst.msk [vmem:[#allocation3 + $0x30] sm:$0xff] %vm325, %v323
    %333 = vst.msk [vmem:[#allocation3 + $0x38] sm:$0xff] %vm325, %v324
    %v334 = vld [vmem:[#allocation4] sm:$0xff]
    %v335 = vld [vmem:[#allocation4 + $0x8] sm:$0xff]
    %v336 = vld [vmem:[#allocation4 + $0x10] sm:$0xff]
    %v337 = vld [vmem:[#allocation4 + $0x18] sm:$0xff]
    %v338 = vld [vmem:[#allocation4 + $0x20] sm:$0xff]
    %v339 = vld [vmem:[#allocation4 + $0x28] sm:$0xff]
    %v340 = vld [vmem:[#allocation4 + $0x30] sm:$0xff]
    %v341 = vld [vmem:[#allocation4 + $0x38] sm:$0xff]
    %v342 = vmul.f32 %v206, %v334
    %v343 = vmul.f32 %v208, %v335
    %v344 = vmul.f32 %v210, %v336
    %v345 = vmul.f32 %v212, %v337
    %v346 = vmul.f32 %v214, %v338
    %v347 = vmul.f32 %v216, %v339
    %v348 = vmul.f32 %v218, %v340
    %v349 = vmul.f32 %v220, %v341
    %v350 = vmul.f32 %v270, %v78
    %v351 = vmul.f32 %v272, %v79
    %v352 = vmul.f32 %v274, %v80
    %v353 = vmul.f32 %v276, %v81
    %v354 = vmul.f32 %v278, %v82
    %v355 = vmul.f32 %v280, %v83
    %v356 = vmul.f32 %v282, %v84
    %v357 = vmul.f32 %v284, %v85
    %358 = vadd.xlane.f32.xlu0 %v350
    %v359 = vpop.xlane.xlu0 %358
    %360 = vadd.xlane.f32.xlu0 %v351
    %v361 = vpop.xlane.xlu0 %360
    %362 = vadd.xlane.f32.xlu0 %v352
    %v363 = vpop.xlane.xlu0 %362
    %364 = vadd.xlane.f32.xlu0 %v353
    %v365 = vpop.xlane.xlu0 %364
    %366 = vadd.xlane.f32.xlu0 %v354
    %v367 = vpop.xlane.xlu0 %366
    %368 = vadd.xlane.f32.xlu0 %v355
    %v369 = vpop.xlane.xlu0 %368
    %370 = vadd.xlane.f32.xlu0 %v356
    %v371 = vpop.xlane.xlu0 %370
    %372 = vadd.xlane.f32.xlu0 %v357
    %v373 = vpop.xlane.xlu0 %372
    %v374 = vadd.f32 %v342, %v359
    %v375 = vadd.f32 %v343, %v361
    %v376 = vadd.f32 %v344, %v363
    %v377 = vadd.f32 %v345, %v365
    %v378 = vadd.f32 %v346, %v367
    %v379 = vadd.f32 %v347, %v369
    %v380 = vadd.f32 %v348, %v371
    %v381 = vadd.f32 %v349, %v373
    %382 = vst.msk [vmem:[#allocation4] sm:$0xff] %vm325, %v374
    %383 = vst.msk [vmem:[#allocation4 + $0x8] sm:$0xff] %vm325, %v375
    %384 = vst.msk [vmem:[#allocation4 + $0x10] sm:$0xff] %vm325, %v376
    %385 = vst.msk [vmem:[#allocation4 + $0x18] sm:$0xff] %vm325, %v377
    %386 = vst.msk [vmem:[#allocation4 + $0x20] sm:$0xff] %vm325, %v378
    %387 = vst.msk [vmem:[#allocation4 + $0x28] sm:$0xff] %vm325, %v379
    %388 = vst.msk [vmem:[#allocation4 + $0x30] sm:$0xff] %vm325, %v380
    %389 = vst.msk [vmem:[#allocation4 + $0x38] sm:$0xff] %vm325, %v381
    %390 = vst.msk [vmem:[#allocation2] sm:$0xff] %vm325, %v189
    %391 = vst.msk [vmem:[#allocation2 + $0x8] sm:$0xff] %vm325, %v190
    %392 = vst.msk [vmem:[#allocation2 + $0x10] sm:$0xff] %vm325, %v191
    %393 = vst.msk [vmem:[#allocation2 + $0x18] sm:$0xff] %vm325, %v192
    %394 = vst.msk [vmem:[#allocation2 + $0x20] sm:$0xff] %vm325, %v193
    %395 = vst.msk [vmem:[#allocation2 + $0x28] sm:$0xff] %vm325, %v194
    %396 = vst.msk [vmem:[#allocation2 + $0x30] sm:$0xff] %vm325, %v195
    %397 = vst.msk [vmem:[#allocation2 + $0x38] sm:$0xff] %vm325, %v196
    // Predicated region
    $region26: #{tpu_custom_call.1} parent=1 // pred_check
      %p398 = pneg %p32
    $region27: #{tpu_custom_call.1} parent=1 // pred_check_branch
      %400 = sbr.rel (%p398) target = $region29
    $region28: #{tpu_custom_call.1} parent=1 // pred_region
      %v401 = vld [vmem:[#allocation4] sm:$0xff]
      %v402 = vld [vmem:[#allocation4 + $0x8] sm:$0xff]
      %v403 = vld [vmem:[#allocation4 + $0x10] sm:$0xff]
      %v404 = vld [vmem:[#allocation4 + $0x18] sm:$0xff]
      %v405 = vld [vmem:[#allocation4 + $0x20] sm:$0xff]
      %v406 = vld [vmem:[#allocation4 + $0x28] sm:$0xff]
      %v407 = vld [vmem:[#allocation4 + $0x30] sm:$0xff]
      %v408 = vld [vmem:[#allocation4 + $0x38] sm:$0xff]
      %v409 = vld [vmem:[#allocation3] sm:$0xff]
      %v410 = vld [vmem:[#allocation3 + $0x8] sm:$0xff]
      %v411 = vld [vmem:[#allocation3 + $0x10] sm:$0xff]
      %v412 = vld [vmem:[#allocation3 + $0x18] sm:$0xff]
      %v413 = vld [vmem:[#allocation3 + $0x20] sm:$0xff]
      %v414 = vld [vmem:[#allocation3 + $0x28] sm:$0xff]
      %v415 = vld [vmem:[#allocation3 + $0x30] sm:$0xff]
      %v416 = vld [vmem:[#allocation3 + $0x38] sm:$0xff]
      %v417 = vrcp.pop %v409
      %v418 = vrcp.pop %v410
      %v419 = vrcp.pop %v411
      %v420 = vrcp.pop %v412
      %v421 = vrcp.pop %v413
      %v422 = vrcp.pop %v414
      %v423 = vrcp.pop %v415
      %v424 = vrcp.pop %v416
      %v425 = vmul.f32 %v401, %v417
      %v426 = vmul.f32 %v402, %v418
      %v427 = vmul.f32 %v403, %v419
      %v428 = vmul.f32 %v404, %v420
      %v429 = vmul.f32 %v405, %v421
      %v430 = vmul.f32 %v406, %v422
      %v431 = vmul.f32 %v407, %v423
      %v432 = vmul.f32 %v408, %v424
      %433 = vst.msk [vmem:[%s4] sm:$0xff] %vm325, %v425
      %434 = vst.msk [vmem:[%s4 + $0x8] sm:$0xff] %vm325, %v426
      %435 = vst.msk [vmem:[%s4 + $0x10] sm:$0xff] %vm325, %v427
      %436 = vst.msk [vmem:[%s4 + $0x18] sm:$0xff] %vm325, %v428
      %437 = vst.msk [vmem:[%s4 + $0x20] sm:$0xff] %vm325, %v429
      %438 = vst.msk [vmem:[%s4 + $0x28] sm:$0xff] %vm325, %v430
      %439 = vst.msk [vmem:[%s4 + $0x30] sm:$0xff] %vm325, %v431
      %440 = vst.msk [vmem:[%s4 + $0x38] sm:$0xff] %vm325, %v432
    $region29: #{tpu_custom_call.1} parent=1 // pred_fallthru
      _
    // Predicated region
    $region30: #{tpu_custom_call.1} parent=1 // pred_check
      _
    $region31: #{tpu_custom_call.1} parent=1 // pred_check_branch
      %442 = sbr.rel (0) target = $region33
    $region32: #{tpu_custom_call.1} parent=1 // pred_region
      _
    $region33: #{tpu_custom_call.1} parent=1 // pred_fallthru
      _
    // Predicated region
    $region34: #{tpu_custom_call.1} parent=1 // pred_check
      _
    $region35: #{tpu_custom_call.1} parent=1 // pred_check_branch
      %444 = sbr.rel (0) target = $region37
    $region36: #{tpu_custom_call.1} parent=1 // pred_region
      _
    $region37: #{tpu_custom_call.1} parent=1 // pred_fallthru
      _
    %445 = vsyncpa [#allocation7], 1

</llo_original>
